<compile_context>
chip_gen: v5e
topology: v5e:2x2
jax: 0.10.0
libtpu: 0.0.40
codegen_flags: <defaults>
</compile_context>

<pallas_src>
import math

import jax
import jax.numpy as jnp
from jax.experimental import pallas as pl
from jax.experimental.pallas import tpu as pltpu

ALPHA = 0.7
LAMBDA = 1.5
THETA = min(1.0, math.log(LAMBDA / 1.0 + 1.0))   # GraphChenn theta for l=1
BN_EPS = 1e-5
NEG_SLOPE = 0.2


def _leaky(v):
    return jnp.where(v >= 0, v, NEG_SLOPE * v)


def _relu(v):
    return jnp.maximum(v, 0.0)


def _dot(a, w):
    return jnp.dot(a, w, preferred_element_type=jnp.float32)


def _full_spec(w):
    nd = w.ndim
    return pl.BlockSpec(w.shape, lambda *_: (0,) * nd)


# --------------------------------------------------------------------------
# Kernel 1: per-row part.  residual = fc(x), f_all = net_in0(x).
# net_in0(x[idx]) == net_in0(x)[idx] (row-wise MLP), so the gather moves to
# the cheap H-wide bf16 f_all instead of the IN-wide x.
# --------------------------------------------------------------------------
def feat_kernel(x_ref, fcw_ref, n0w1_ref, n0w2_ref, bvec_ref, res_ref, f_ref):
    x = x_ref[...].astype(jnp.bfloat16)           # (bt, IN), cast is VPU filler
    fc_b = bvec_ref[0:1, :]
    n0_b1 = bvec_ref[1:2, :]
    n0_b2 = bvec_ref[2:3, :]

    res_ref[...] = _dot(x, fcw_ref[...]) + fc_b                       # (bt, H)
    h1 = _leaky(_dot(x, n0w1_ref[...]) + n0_b1)                       # (bt, H)
    f = _leaky(_dot(h1.astype(jnp.bfloat16), n0w2_ref[...]) + n0_b2)  # (bt, H)
    f_ref[...] = f.astype(jnp.bfloat16)


# --------------------------------------------------------------------------
# Kernel 2: neighbor combine + GraphChenn + head.
# --------------------------------------------------------------------------
def combine_kernel(fg_ref, geom_ref, res_ref,
                   cw1_ref, cb1_ref, cw2_ref, cb2_ref,
                   mlpw_ref, linw_ref, chenw_ref,
                   vecs_ref, scal_ref,
                   o_ref):
    bt, h = res_ref.shape
    rows = fg_ref.shape[0]
    k = rows // bt

    geom = geom_ref[...]                          # (rows, 4) = [x, y, z, w]
    w = geom[:, 3:4]

    # conv[0][0]: Linear(3, Cuts) + ReLU on the VPU (contraction dim is 3)
    cw1 = cw1_ref[...]                            # (3, Cuts)
    c = _relu(geom[:, 0:1] * cw1[0:1, :]
              + geom[:, 1:2] * cw1[1:2, :]
              + geom[:, 2:3] * cw1[2:3, :]
              + cb1_ref[...])                     # (rows, Cuts)

    # conv[0][2]: only the first 3 output columns of P_ij are ever used
    p = _dot(c, cw2_ref[...]) + cb2_ref[...]      # (rows, 3)
    pw = p * w                                    # window weight folded into p

    # sum over the K neighbors BEFORE the mlp matmuls:
    #   weighted = q0@W0 + q1@W1 + q2@W2 + (sum_K w) * mlp_b
    fg = fg_ref[...].astype(jnp.float32)          # (rows, H)
    q0 = jnp.sum((pw[:, 0:1] * fg).reshape(bt, k, h), axis=1)         # (bt, H)
    q1 = jnp.sum((pw[:, 1:2] * fg).reshape(bt, k, h), axis=1)
    q2 = jnp.sum((pw[:, 2:3] * fg).reshape(bt, k, h), axis=1)
    wsum = jnp.sum(w.reshape(bt, k, 1), axis=1)                       # (bt, 1)

    mlp_b = vecs_ref[0:1, :]
    lin_b = vecs_ref[1:2, :]
    out_w1 = vecs_ref[2:3, :]

    weighted = (_dot(q0.astype(jnp.bfloat16), mlpw_ref[0])
                + _dot(q1.astype(jnp.bfloat16), mlpw_ref[1])
                + _dot(q2.astype(jnp.bfloat16), mlpw_ref[2])
                + wsum * mlp_b)                                       # (bt, H)

    # BatchNorm (eval) is folded into linw/lin_b in the wrapper
    lin = _relu(_dot(weighted.astype(jnp.bfloat16), linw_ref[...]) + lin_b)

    # GraphChenn: theta*mm(support,W) + (1-theta)*support + input, then ReLU
    support = (1.0 - ALPHA) * lin + ALPHA * res_ref[...]
    chen = (THETA * _dot(support.astype(jnp.bfloat16), chenw_ref[...])
            + (1.0 - THETA) * support + lin)
    layer_inner = _relu(chen)                                         # (bt, H)

    # net_out: Linear(H,1) -> LeakyReLU -> Linear(1,1) -> LeakyReLU
    #          -> Dropout(identity) -> Sigmoid
    ob1 = scal_ref[:, 0:1]
    ow2 = scal_ref[:, 1:2]
    ob2 = scal_ref[:, 2:3]
    o1 = _leaky(jnp.sum(layer_inner * out_w1, axis=-1, keepdims=True) + ob1)
    o2 = _leaky(o1 * ow2 + ob2)                                       # (bt, 1)
    o_ref[...] = 1.0 / (1.0 + jnp.exp(-o2))


# --------------------------------------------------------------------------
# Wrapper
# --------------------------------------------------------------------------
def spatconv_forward(x, window_ij_t, current_xyz_nb, current_xyz_id, params,
                     bt=None):
    """x: [B, IN], window_ij_t: [B, 1, K], current_xyz_nb: [B, K, 3],
    current_xyz_id: [B, K] int32 indices into rows of x.  Returns [B]."""
    B, IN = x.shape
    K = window_ij_t.shape[2]
    H = params["fc_w"].shape[1]
    f32, bf16 = jnp.float32, jnp.bfloat16

    # --- batch-tile selection ------------------------------------------------
    if bt is None:
        if B <= 16:
            bt = ((B + 7) // 8) * 8                 # single tile for tiny batches
        else:
            # aim for >=2 grid steps (v7x megacore) with a VMEM-friendly cap;
            # multiple of 16 keeps bf16 sublane tiling happy for multi-tile runs.
            bt = min(512, ((B // 2 + 15) // 16) * 16)
    Bp = pl.cdiv(B, bt) * bt
    n_tiles = Bp // bt

    pad = Bp - B
    if pad:
        x = jnp.pad(x, ((0, pad), (0, 0)))
        window_ij_t = jnp.pad(window_ij_t, ((0, pad), (0, 0), (0, 0)))
        current_xyz_nb = jnp.pad(current_xyz_nb, ((0, pad), (0, 0), (0, 0)))
        current_xyz_id = jnp.pad(current_xyz_id, ((0, pad), (0, 0)))

    # --- weight preprocessing --------------------------------------------------
    # eval-mode BatchNorm folded into linear_layers[0]
    s = params["bn_g"] * jax.lax.rsqrt(params["bn_v"] + BN_EPS)       # (1, H)
    t = params["bn_b"] - params["bn_m"] * s                           # (1, H)
    lin_w = jnp.reshape(s, (H, 1)) * params["lin_w"]                  # (H, H)
    lin_b = t @ params["lin_w"] + params["lin_b"]                     # (1, H)

    bvec = jnp.concatenate(
        [params["fc_b"], params["n0_b1"], params["n0_b2"]], axis=0).astype(f32)
    mlpw = jnp.stack([params["mlp_w"][0:H],
                      params["mlp_w"][H:2 * H],
                      params["mlp_w"][2 * H:3 * H]], axis=0).astype(bf16)
    vecs = jnp.concatenate(
        [params["mlp_b"], lin_b, params["out_w1"]], axis=0).astype(f32)
    scal = jnp.concatenate(
        [params["out_b1"], params["out_w2"], params["out_b2"],
         jnp.zeros((1, 1), f32)], axis=1).astype(f32)                 # (1, 4)
    cw2 = params["cv_w2"][:, :3].astype(f32)                          # used cols only
    cb2 = params["cv_b2"][:, :3].astype(f32)

    # --- kernel 1: residual / net_in0 on the unique x rows --------------------
    k1_weights = [params["fc_w"].astype(bf16),
                  params["n0_w1"].astype(bf16),
                  params["n0_w2"].astype(bf16),
                  bvec]
    res, f_all = pl.pallas_call(
        feat_kernel,
        out_shape=(jax.ShapeDtypeStruct((Bp, H), f32),
                   jax.ShapeDtypeStruct((Bp, H), bf16)),
        grid=(n_tiles,),
        in_specs=[pl.BlockSpec((bt, IN), lambda i: (i, 0))]
                 + [_full_spec(w) for w in k1_weights],
        out_specs=(pl.BlockSpec((bt, H), lambda i: (i, 0)),
                   pl.BlockSpec((bt, H), lambda i: (i, 0))),
        compiler_params=pltpu.CompilerParams(dimension_semantics=("parallel",)),
    )(x.astype(f32), *k1_weights)

    # --- glue: gather H-wide bf16 neighbor features, pack coords + weights ----
    idx = current_xyz_id.reshape(-1).astype(jnp.int32)
    fg = jnp.take(f_all, idx, axis=0)                                  # (Bp*K, H) bf16
    geom = jnp.concatenate(
        [current_xyz_nb.reshape(Bp * K, 3).astype(f32),
         window_ij_t[:, 0, :].reshape(Bp * K, 1).astype(f32)], axis=-1)  # (Bp*K, 4)

    # --- kernel 2: combine + GraphChenn + head --------------------------------
    k2_weights = [params["cv_w1"].astype(f32), params["cv_b1"].astype(f32),
                  cw2, cb2,
                  mlpw, lin_w.astype(bf16), params["chen_w"].astype(bf16),
                  vecs, scal]
    out = pl.pallas_call(
        combine_kernel,
        out_shape=jax.ShapeDtypeStruct((Bp, 1), f32),
        grid=(n_tiles,),
        in_specs=[pl.BlockSpec((bt * K, H), lambda i: (i, 0)),
                  pl.BlockSpec((bt * K, 4), lambda i: (i, 0)),
                  pl.BlockSpec((bt, H), lambda i: (i, 0))]
                 + [_full_spec(w) for w in k2_weights],
        out_specs=pl.BlockSpec((bt, 1), lambda i: (i, 0)),
        compiler_params=pltpu.CompilerParams(dimension_semantics=("parallel",)),
    )(fg, geom, res, *k2_weights)

    return out[:B, 0]   # matches PyTorch output.squeeze() -> (B,)


# --------------------------------------------------------------------------
# Parameters + pure-JAX reference
# --------------------------------------------------------------------------
def init_params(key, in_dim, hidden, cuts):
    ks = jax.random.split(key, 24)

    def n(i, shape, s=0.1):
        return s * jax.random.normal(ks[i], shape, jnp.float32)

    return {
        "fc_w": n(0, (in_dim, hidden)),      "fc_b": n(1, (1, hidden)),
        "n0_w1": n(2, (in_dim, hidden)),     "n0_b1": n(3, (1, hidden)),
        "n0_w2": n(4, (hidden, hidden)),     "n0_b2": n(5, (1, hidden)),
        "cv_w1": n(6, (3, cuts), 1.0),       "cv_b1": n(7, (1, cuts)),
        "cv_w2": n(8, (cuts, hidden)),       "cv_b2": n(9, (1, hidden)),
        "mlp_w": n(10, (3 * hidden, hidden)), "mlp_b": n(11, (1, hidden)),
        "bn_g": 1.0 + n(12, (1, hidden)),    "bn_b": n(13, (1, hidden)),
        "bn_m": n(14, (1, hidden)),
        "bn_v": 1.0 + 0.1 * jnp.abs(jax.random.normal(ks[15], (1, hidden), jnp.float32)),
        "lin_w": n(16, (hidden, hidden)),    "lin_b": n(17, (1, hidden)),
        "chen_w": n(18, (hidden, hidden)),
        "out_w1": n(19, (1, hidden)),        "out_b1": n(20, (1, 1)),
        "out_w2": n(21, (1, 1), 1.0),        "out_b2": n(22, (1, 1)),
    }


def reference_forward(x, window_ij_t, current_xyz_nb, current_xyz_id, p):
    """Pure-JAX f32 reference (inference semantics) for a numerical check."""
    B, IN = x.shape
    K = window_ij_t.shape[2]
    hp = jax.lax.Precision.HIGHEST
    dot = lambda a, w: jnp.dot(a, w, precision=hp)
    leaky = lambda v: jnp.where(v >= 0, v, NEG_SLOPE * v)
    relu = lambda v: jnp.maximum(v, 0.0)

    residual = dot(x, p["fc_w"]) + p["fc_b"]
    xg = x[current_xyz_id.reshape(-1)]
    h = leaky(dot(xg, p["n0_w1"]) + p["n0_b1"])
    f_j = leaky(dot(h, p["n0_w2"]) + p["n0_b2"])
    c = relu(dot(current_xyz_nb.reshape(B * K, 3), p["cv_w1"]) + p["cv_b1"])
    p_ij = dot(c, p["cv_w2"]) + p["cv_b2"]
    concat = jnp.concatenate(
        [p_ij[:, 0:1] * f_j, p_ij[:, 1:2] * f_j, p_ij[:, 2:3] * f_j], axis=-1)
    transformed = dot(concat, p["mlp_w"]) + p["mlp_b"]
    w = window_ij_t[:, 0, :].reshape(B * K, 1)
    weighted = (w * transformed).reshape(B, K, -1).sum(axis=1)
    bn = (weighted - p["bn_m"]) / jnp.sqrt(p["bn_v"] + BN_EPS) * p["bn_g"] + p["bn_b"]
    lin = relu(dot(bn, p["lin_w"]) + p["lin_b"])
    support = (1.0 - ALPHA) * lin + ALPHA * residual
    chen = THETA * dot(support, p["chen_w"]) + (1.0 - THETA) * support + lin
    layer_inner = relu(chen)
    o1 = leaky(jnp.sum(layer_inner * p["out_w1"], axis=-1, keepdims=True) + p["out_b1"])
    o2 = leaky(o1 * p["out_w2"] + p["out_b2"])
    return jax.nn.sigmoid(o2)[:, 0]


if __name__ == "__main__":
    B, IN, K, H, CUTS = 8, 128, 8, 64, 16   # small shapes; Hidden=64, Cuts=16 per module

    key = jax.random.PRNGKey(0)
    k1, k2, k3, k4, kp = jax.random.split(key, 5)
    x = jax.random.normal(k1, (B, IN), jnp.float32)
    window_ij_t = jax.random.uniform(k2, (B, 1, K), jnp.float32)
    current_xyz_nb = jax.random.normal(k3, (B, K, 3), jnp.float32)
    current_xyz_id = jax.random.randint(k4, (B, K), 0, B, jnp.int32)
    params = init_params(kp, IN, H, CUTS)

    out = spatconv_forward(x, window_ij_t, current_xyz_nb, current_xyz_id, params)
    out = jax.block_until_ready(out)

    ref = reference_forward(x, window_ij_t, current_xyz_nb, current_xyz_id, params)
    assert out.shape == (B,)
    # tolerance accounts for deliberate bf16 MXU operands vs the f32 reference
    assert jnp.allclose(out, ref, atol=2e-2, rtol=2e-2), "kernel/reference mismatch"
    print("KERNEL_OK")
</pallas_src>

<mosaic_0001>
module attributes {stable_mosaic.version = 11 : i64} {
  func.func @feat_kernel(%arg0: i32, %arg1: memref<8x128xf32, #tpu.memory_space<vmem>>, %arg2: memref<128x64xbf16, #tpu.memory_space<vmem>>, %arg3: memref<128x64xbf16, #tpu.memory_space<vmem>>, %arg4: memref<64x64xbf16, #tpu.memory_space<vmem>>, %arg5: memref<3x64xf32, #tpu.memory_space<vmem>>, %arg6: memref<8x64xf32, #tpu.memory_space<vmem>>, %arg7: memref<8x64xbf16, #tpu.memory_space<vmem>>) attributes {dimension_semantics = [#tpu.dimension_semantics<parallel>], iteration_bounds = array<i64: 1>, scalar_prefetch = 0 : i64, scratch_operands = 0 : i64, tpu.core_type = #tpu.core_type<tc>, window_params = [{transform_indices = @transform_0, window_bounds = array<i64: 8, 128>}, {pipeline_mode = #tpu.pipeline_mode<synchronous>, transform_indices = @transform_1, window_bounds = array<i64: 128, 64>}, {pipeline_mode = #tpu.pipeline_mode<synchronous>, transform_indices = @transform_2, window_bounds = array<i64: 128, 64>}, {pipeline_mode = #tpu.pipeline_mode<synchronous>, transform_indices = @transform_3, window_bounds = array<i64: 64, 64>}, {pipeline_mode = #tpu.pipeline_mode<synchronous>, transform_indices = @transform_4, window_bounds = array<i64: 3, 64>}, {transform_indices = @transform_5, window_bounds = array<i64: 8, 64>}, {transform_indices = @transform_6, window_bounds = array<i64: 8, 64>}]} {
    %c0 = arith.constant 0 : index
    %c0_0 = arith.constant 0 : index
    %0 = vector.load %arg1[%c0, %c0_0] : memref<8x128xf32, #tpu.memory_space<vmem>>, vector<8x128xf32>
    %1 = arith.truncf %0 : vector<8x128xf32> to vector<8x128xbf16>
    %c0_1 = arith.constant 0 : index
    %c0_2 = arith.constant 0 : index
    %2 = vector.load %arg5[%c0_1, %c0_2] : memref<3x64xf32, #tpu.memory_space<vmem>>, vector<1x64xf32>
    %c1 = arith.constant 1 : index
    %c0_3 = arith.constant 0 : index
    %3 = vector.load %arg5[%c1, %c0_3] : memref<3x64xf32, #tpu.memory_space<vmem>>, vector<1x64xf32>
    %c2 = arith.constant 2 : index
    %c0_4 = arith.constant 0 : index
    %4 = vector.load %arg5[%c2, %c0_4] : memref<3x64xf32, #tpu.memory_space<vmem>>, vector<1x64xf32>
    %c0_5 = arith.constant 0 : index
    %c0_6 = arith.constant 0 : index
    %5 = vector.load %arg2[%c0_5, %c0_6] : memref<128x64xbf16, #tpu.memory_space<vmem>>, vector<128x64xbf16>
    %cst = arith.constant dense<0.000000e+00> : vector<8x64xf32>
    %6 = tpu.matmul %1, %5, %cst {dimension_numbers = #tpu.dot_dimension_numbers<[1], [0], [0], [1], [0, 0, 1, 1], [], []>} : vector<8x128xbf16>, vector<128x64xbf16>, vector<8x64xf32> -> vector<8x64xf32>
    %7 = vector.broadcast %2 : vector<1x64xf32> to vector<8x64xf32>
    %8 = arith.addf %6, %7 : vector<8x64xf32>
    %c0_7 = arith.constant 0 : index
    %c0_8 = arith.constant 0 : index
    %9 = vector.load %arg6[%c0_7, %c0_8] : memref<8x64xf32, #tpu.memory_space<vmem>>, vector<8x64xf32>
    tpu.vector_store %arg6[%c0_7, %c0_8], %8 {strides = array<i32>} : memref<8x64xf32, #tpu.memory_space<vmem>>, vector<8x64xf32>,
    %c0_9 = arith.constant 0 : index
    %c0_10 = arith.constant 0 : index
    %10 = vector.load %arg3[%c0_9, %c0_10] : memref<128x64xbf16, #tpu.memory_space<vmem>>, vector<128x64xbf16>
    %cst_11 = arith.constant dense<0.000000e+00> : vector<8x64xf32>
    %11 = tpu.matmul %1, %10, %cst_11 {dimension_numbers = #tpu.dot_dimension_numbers<[1], [0], [0], [1], [0, 0, 1, 1], [], []>} : vector<8x128xbf16>, vector<128x64xbf16>, vector<8x64xf32> -> vector<8x64xf32>
    %12 = vector.broadcast %3 : vector<1x64xf32> to vector<8x64xf32>
    %13 = arith.addf %11, %12 : vector<8x64xf32>
    %cst_12 = arith.constant 0.000000e+00 : f32
    %14 = vector.broadcast %cst_12 : f32 to vector<8x64xf32>
    %15 = arith.cmpf oge, %13, %14 : vector<8x64xf32>
    %cst_13 = arith.constant 2.000000e-01 : f32
    %16 = vector.broadcast %cst_13 : f32 to vector<8x64xf32>
    %17 = arith.mulf %16, %13 : vector<8x64xf32>
    %18 = arith.select %15, %13, %17 : vector<8x64xi1>, vector<8x64xf32>
    %19 = arith.truncf %18 : vector<8x64xf32> to vector<8x64xbf16>
    %c0_14 = arith.constant 0 : index
    %c0_15 = arith.constant 0 : index
    %20 = vector.load %arg4[%c0_14, %c0_15] : memref<64x64xbf16, #tpu.memory_space<vmem>>, vector<64x64xbf16>
    %cst_16 = arith.constant dense<0.000000e+00> : vector<8x64xf32>
    %21 = tpu.matmul %19, %20, %cst_16 {dimension_numbers = #tpu.dot_dimension_numbers<[1], [0], [0], [1], [0, 0, 1, 1], [], []>} : vector<8x64xbf16>, vector<64x64xbf16>, vector<8x64xf32> -> vector<8x64xf32>
    %22 = vector.broadcast %4 : vector<1x64xf32> to vector<8x64xf32>
    %23 = arith.addf %21, %22 : vector<8x64xf32>
    %cst_17 = arith.constant 0.000000e+00 : f32
    %24 = vector.broadcast %cst_17 : f32 to vector<8x64xf32>
    %25 = arith.cmpf oge, %23, %24 : vector<8x64xf32>
    %cst_18 = arith.constant 2.000000e-01 : f32
    %26 = vector.broadcast %cst_18 : f32 to vector<8x64xf32>
    %27 = arith.mulf %26, %23 : vector<8x64xf32>
    %28 = arith.select %25, %23, %27 : vector<8x64xi1>, vector<8x64xf32>
    %29 = arith.truncf %28 : vector<8x64xf32> to vector<8x64xbf16>
    %c0_19 = arith.constant 0 : index
    %c0_20 = arith.constant 0 : index
    %30 = vector.load %arg7[%c0_19, %c0_20] : memref<8x64xbf16, #tpu.memory_space<vmem>>, vector<8x64xbf16>
    tpu.vector_store %arg7[%c0_19, %c0_20], %29 {strides = array<i32>} : memref<8x64xbf16, #tpu.memory_space<vmem>>, vector<8x64xbf16>,
    return
  }
  func.func @transform_0(%arg0: i32) -> (i32, i32) {
    %c0_i32 = arith.constant 0 : i32
    %c0_i32_0 = arith.constant 0 : i32
    return %arg0, %c0_i32 : i32, i32
  }
  func.func @transform_1(%arg0: i32) -> (i32, i32) {
    %c0_i32 = arith.constant 0 : i32
    %c0_i32_0 = arith.constant 0 : i32
    %c0_i32_1 = arith.constant 0 : i32
    return %c0_i32, %c0_i32_0 : i32, i32
  }
  func.func @transform_2(%arg0: i32) -> (i32, i32) {
    %c0_i32 = arith.constant 0 : i32
    %c0_i32_0 = arith.constant 0 : i32
    %c0_i32_1 = arith.constant 0 : i32
    return %c0_i32, %c0_i32_0 : i32, i32
  }
  func.func @transform_3(%arg0: i32) -> (i32, i32) {
    %c0_i32 = arith.constant 0 : i32
    %c0_i32_0 = arith.constant 0 : i32
    %c0_i32_1 = arith.constant 0 : i32
    return %c0_i32, %c0_i32_0 : i32, i32
  }
  func.func @transform_4(%arg0: i32) -> (i32, i32) {
    %c0_i32 = arith.constant 0 : i32
    %c0_i32_0 = arith.constant 0 : i32
    %c0_i32_1 = arith.constant 0 : i32
    return %c0_i32, %c0_i32_0 : i32, i32
  }
  func.func @transform_5(%arg0: i32) -> (i32, i32) {
    %c0_i32 = arith.constant 0 : i32
    %c0_i32_0 = arith.constant 0 : i32
    return %arg0, %c0_i32 : i32, i32
  }
  func.func @transform_6(%arg0: i32) -> (i32, i32) {
    %c0_i32 = arith.constant 0 : i32
    %c0_i32_0 = arith.constant 0 : i32
    return %arg0, %c0_i32 : i32, i32
  }
}

</mosaic_0001>

<llo_original>
// kernel: tpu_custom_call.1
$region0: #{tpu_custom_call.1}
  #allocation0 [shape = 'u32[]', space=smem, size = 0x4, offset = 0x4, fixed_abs, tag = 'smem constant byte address 0x4 - core index']
  #allocation1 [shape = 'u32[72,128]{1,0:T(1,128)}', space=vmem, size = 0x9000, scoped, tag = 'internal scratch']
  %s0 = inlined_call_operand.vmem [shape: f32[8,128], index: 0, kind: input, shape index: {}]
  %s1 = inlined_call_operand.vmem [shape: bf16[128,64], index: 1, kind: input, shape index: {}]
  %s2 = inlined_call_operand.vmem [shape: bf16[128,64], index: 2, kind: input, shape index: {}]
  %s3 = inlined_call_operand.vmem [shape: bf16[64,64], index: 3, kind: input, shape index: {}]
  %s4 = inlined_call_operand.vmem [shape: f32[3,64], index: 4, kind: input, shape index: {}]
  %s5 = inlined_call_operand.hbm [shape: f32[8,64], index: 5, kind: output, shape index: {0}]
  %s6 = inlined_call_operand.hbm [shape: bf16[8,64], index: 6, kind: output, shape index: {1}]
  %7 = xla_tuple %s5, %s6
  %s8 = sld [smem:[#allocation0]]
  $region38: #{tpu_custom_call.1} parent=0
    _
  %s10 = ssub.s32 1, %s8
  %s11 = scalar_select 0, %s10, %s8
  $region1: #{tpu_custom_call.1} parent=0
    #allocation2 [shape = 'u8[4096]{0}', space=vmem, size = 0x1000, scoped, tag = 'output window, operand 0, single buffered']
    #allocation3 [shape = 's32[1]{0}', space=sflag, size = 0x4, scoped, tag = 'scoped memory for tpu_custom_call.1']
    #allocation4 [shape = 'u8[2048]{0}', space=vmem, size = 0x800, scoped, tag = 'output window, operand 1, single buffered']
    #allocation5 [shape = 's32[1]{0}', space=sflag, size = 0x4, scoped, tag = 'scoped memory for tpu_custom_call.1']
    %12 = vsyncpa [#allocation3], 0
    %13 = vsyncpa [#allocation5], 0
    // Predicated region
    $region2: #{tpu_custom_call.1} parent=1 // pred_check
      _
    $region3: #{tpu_custom_call.1} parent=1 // pred_check_branch
      %15 = sbr.rel (0) target = $region5
    $region4: #{tpu_custom_call.1} parent=1 // pred_region
      _
    $region5: #{tpu_custom_call.1} parent=1 // pred_fallthru
      _
    // Predicated region
    $region6: #{tpu_custom_call.1} parent=1 // pred_check
      _
    $region7: #{tpu_custom_call.1} parent=1 // pred_check_branch
      %17 = sbr.rel (0) target = $region9
    $region8: #{tpu_custom_call.1} parent=1 // pred_region
      _
    $region9: #{tpu_custom_call.1} parent=1 // pred_fallthru
      _
    // Predicated region
    $region10: #{tpu_custom_call.1} parent=1 // pred_check
      _
    $region11: #{tpu_custom_call.1} parent=1 // pred_check_branch
      %19 = sbr.rel (0) target = $region13
    $region12: #{tpu_custom_call.1} parent=1 // pred_region
      _
    $region13: #{tpu_custom_call.1} parent=1 // pred_fallthru
      _
    // Predicated region
    $region14: #{tpu_custom_call.1} parent=1 // pred_check
      _
    $region15: #{tpu_custom_call.1} parent=1 // pred_check_branch
      %21 = sbr.rel (0) target = $region17
    $region16: #{tpu_custom_call.1} parent=1 // pred_region
      _
    $region17: #{tpu_custom_call.1} parent=1 // pred_fallthru
      _
    // Predicated region
    $region18: #{tpu_custom_call.1} parent=1 // pred_check
      _
    $region19: #{tpu_custom_call.1} parent=1 // pred_check_branch
      %23 = sbr.rel (0) target = $region21
    $region20: #{tpu_custom_call.1} parent=1 // pred_region
      _
    $region21: #{tpu_custom_call.1} parent=1 // pred_fallthru
      _
    %v25 = vld [vmem:[%s0] sm:$0xff]
    %v26 = vpack.c.bf16 %v25, %v25
    %v27 = vld [vmem:[%s4] sm:$0x1]
    %v28 = vld [vmem:[%s4 + $0x1] sm:$0x1]
    %v29 = vld [vmem:[%s4 + $0x2] sm:$0x1]
    %v30 = vld [vmem:[%s1] sm:$0xf]
    %v31 = vld [vmem:[%s1 + $0x4] sm:$0xf]
    %v32 = vld [vmem:[%s1 + $0x8] sm:$0xf]
    %v33 = vld [vmem:[%s1 + $0xc] sm:$0xf]
    %v34 = vld [vmem:[%s1 + $0x10] sm:$0xf]
    %v35 = vld [vmem:[%s1 + $0x14] sm:$0xf]
    %v36 = vld [vmem:[%s1 + $0x18] sm:$0xf]
    %v37 = vld [vmem:[%s1 + $0x1c] sm:$0xf]
    %v38 = vld [vmem:[%s1 + $0x20] sm:$0xf]
    %v39 = vld [vmem:[%s1 + $0x24] sm:$0xf]
    %v40 = vld [vmem:[%s1 + $0x28] sm:$0xf]
    %v41 = vld [vmem:[%s1 + $0x2c] sm:$0xf]
    %v42 = vld [vmem:[%s1 + $0x30] sm:$0xf]
    %v43 = vld [vmem:[%s1 + $0x34] sm:$0xf]
    %v44 = vld [vmem:[%s1 + $0x38] sm:$0xf]
    %v45 = vld [vmem:[%s1 + $0x3c] sm:$0xf]
    %v46 = vperm.slane %v27, 0
    %v63 = vunpack.c.l.b16 %v30
    %v64 = vunpack.c.l.b16 %v31
    %v65 = vunpack.c.l.b16 %v32
    %v66 = vunpack.c.l.b16 %v33
    %v67 = vunpack.c.l.b16 %v34
    %v68 = vunpack.c.l.b16 %v35
    %v69 = vunpack.c.l.b16 %v36
    %v70 = vunpack.c.l.b16 %v37
    %v71 = vunpack.c.l.b16 %v38
    %v72 = vunpack.c.l.b16 %v39
    %v73 = vunpack.c.l.b16 %v40
    %v74 = vunpack.c.l.b16 %v41
    %v75 = vunpack.c.l.b16 %v42
    %v76 = vunpack.c.l.b16 %v43
    %v77 = vunpack.c.l.b16 %v44
    %v78 = vunpack.c.l.b16 %v45
    %v79 = vpack.c.b16 %v64, %v63
    %v80 = vpack.c.b16 %v66, %v65
    %v81 = vpack.c.b16 %v68, %v67
    %v82 = vpack.c.b16 %v70, %v69
    %v83 = vpack.c.b16 %v72, %v71
    %v84 = vpack.c.b16 %v74, %v73
    %v85 = vpack.c.b16 %v76, %v75
    %v86 = vpack.c.b16 %v78, %v77
    %95 = vmatpush.bf16.msra.mxu0 %v86
    %96 = vmatpush.bf16.msra.mxu0 %v85
    %97 = vmatpush.bf16.msra.mxu0 %v84
    %98 = vmatpush.bf16.msra.mxu0 %v83
    %99 = vmatpush.bf16.msra.mxu0 %v82
    %100 = vmatpush.bf16.msra.mxu0 %v81
    %101 = vmatpush.bf16.msra.mxu0 %v80
    %102 = vmatpush.bf16.msra.mxu0 %v79
    %103 = vmatmul.bf16.gmra.mxu0 %v26
    %v104 = vpop.f32.mrf.mxu0
    %v105 = vadd.f32 %v46, %v104
    %v106 = vpop.f32.mrf.mxu0
    %107 = vdwg.mxu0
    %vm108 = vcmask 523264
    %109 = vst.msk [vmem:[#allocation2] sm:$0xff] %vm108, %v105
    %v110 = vld [vmem:[%s2] sm:$0xf]
    %v111 = vld [vmem:[%s2 + $0x4] sm:$0xf]
    %v112 = vld [vmem:[%s2 + $0x8] sm:$0xf]
    %v113 = vld [vmem:[%s2 + $0xc] sm:$0xf]
    %v114 = vld [vmem:[%s2 + $0x10] sm:$0xf]
    %v115 = vld [vmem:[%s2 + $0x14] sm:$0xf]
    %v116 = vld [vmem:[%s2 + $0x18] sm:$0xf]
    %v117 = vld [vmem:[%s2 + $0x1c] sm:$0xf]
    %v118 = vld [vmem:[%s2 + $0x20] sm:$0xf]
    %v119 = vld [vmem:[%s2 + $0x24] sm:$0xf]
    %v120 = vld [vmem:[%s2 + $0x28] sm:$0xf]
    %v121 = vld [vmem:[%s2 + $0x2c] sm:$0xf]
    %v122 = vld [vmem:[%s2 + $0x30] sm:$0xf]
    %v123 = vld [vmem:[%s2 + $0x34] sm:$0xf]
    %v124 = vld [vmem:[%s2 + $0x38] sm:$0xf]
    %v125 = vld [vmem:[%s2 + $0x3c] sm:$0xf]
    %v126 = vperm.slane %v28, 0
    %v143 = vunpack.c.l.b16 %v110
    %v144 = vunpack.c.l.b16 %v111
    %v145 = vunpack.c.l.b16 %v112
    %v146 = vunpack.c.l.b16 %v113
    %v147 = vunpack.c.l.b16 %v114
    %v148 = vunpack.c.l.b16 %v115
    %v149 = vunpack.c.l.b16 %v116
    %v150 = vunpack.c.l.b16 %v117
    %v151 = vunpack.c.l.b16 %v118
    %v152 = vunpack.c.l.b16 %v119
    %v153 = vunpack.c.l.b16 %v120
    %v154 = vunpack.c.l.b16 %v121
    %v155 = vunpack.c.l.b16 %v122
    %v156 = vunpack.c.l.b16 %v123
    %v157 = vunpack.c.l.b16 %v124
    %v158 = vunpack.c.l.b16 %v125
    %v159 = vpack.c.b16 %v144, %v143
    %v160 = vpack.c.b16 %v146, %v145
    %v161 = vpack.c.b16 %v148, %v147
    %v162 = vpack.c.b16 %v150, %v149
    %v163 = vpack.c.b16 %v152, %v151
    %v164 = vpack.c.b16 %v154, %v153
    %v165 = vpack.c.b16 %v156, %v155
    %v166 = vpack.c.b16 %v158, %v157
    %175 = vmatpush.bf16.msra.mxu0 %v166
    %176 = vmatpush.bf16.msra.mxu0 %v165
    %177 = vmatpush.bf16.msra.mxu0 %v164
    %178 = vmatpush.bf16.msra.mxu0 %v163
    %179 = vmatpush.bf16.msra.mxu0 %v162
    %180 = vmatpush.bf16.msra.mxu0 %v161
    %181 = vmatpush.bf16.msra.mxu0 %v160
    %182 = vmatpush.bf16.msra.mxu0 %v159
    %183 = vmatmul.bf16.gmra.mxu0 %v26
    %v184 = vpop.f32.mrf.mxu0
    %v185 = vadd.f32 %v126, %v184
    %v186 = vpop.f32.mrf.mxu0
    %187 = vdwg.mxu0
    %vm188 = vcmp.ge.f32.partialorder %v185, 0.0
    %v189 = vmul.f32 %v185, 0.2
    %v190 = vsel %vm188, %v185, %v189
    %v191 = vpack.c.bf16 %v190, %v190
    %v192 = vld [vmem:[%s3] sm:$0xf]
    %v193 = vld [vmem:[%s3 + $0x4] sm:$0xf]
    %v194 = vld [vmem:[%s3 + $0x8] sm:$0xf]
    %v195 = vld [vmem:[%s3 + $0xc] sm:$0xf]
    %v196 = vld [vmem:[%s3 + $0x10] sm:$0xf]
    %v197 = vld [vmem:[%s3 + $0x14] sm:$0xf]
    %v198 = vld [vmem:[%s3 + $0x18] sm:$0xf]
    %v199 = vld [vmem:[%s3 + $0x1c] sm:$0xf]
    %v200 = vperm.slane %v29, 0
    %v209 = vunpack.c.l.b16 %v192
    %v210 = vunpack.c.l.b16 %v193
    %v211 = vunpack.c.l.b16 %v194
    %v212 = vunpack.c.l.b16 %v195
    %v213 = vunpack.c.l.b16 %v196
    %v214 = vunpack.c.l.b16 %v197
    %v215 = vunpack.c.l.b16 %v198
    %v216 = vunpack.c.l.b16 %v199
    %v217 = vpack.c.b16 %v210, %v209
    %v218 = vpack.c.b16 %v212, %v211
    %v219 = vpack.c.b16 %v214, %v213
    %v220 = vpack.c.b16 %v216, %v215
    %v226 = vsel %vm108, %v191, 0
    %228 = vmatpush.bf16.msra.mxu0 0
    %229 = vmatpush.bf16.msra.mxu0 0
    %230 = vmatpush.bf16.msra.mxu0 0
    %231 = vmatpush.bf16.msra.mxu0 0
    %232 = vmatpush.bf16.msra.mxu0 %v220
    %233 = vmatpush.bf16.msra.mxu0 %v219
    %234 = vmatpush.bf16.msra.mxu0 %v218
    %235 = vmatpush.bf16.msra.mxu0 %v217
    %236 = vmatmul.bf16.gmra.mxu0 %v226
    %v237 = vpop.f32.mrf.mxu0
    %v238 = vadd.f32 %v200, %v237
    %v239 = vpop.f32.mrf.mxu0
    %240 = vdwg.mxu0
    %vm241 = vcmp.ge.f32.partialorder %v238, 0.0
    %v242 = vmul.f32 %v238, 0.2
    %v243 = vsel %vm241, %v238, %v242
    %v244 = vpack.c.bf16 %v243, %v243
    %vm245 = vcmask 519168
    %246 = vst.msk [vmem:[#allocation4] sm:$0xf] %vm245, %v244
    // Predicated region
    $region22: #{tpu_custom_call.1} parent=1 // pred_check
      _
    $region23: #{tpu_custom_call.1} parent=1 // pred_check_branch
      %248 = sbr.rel (0) target = $region25
    $region24: #{tpu_custom_call.1} parent=1 // pred_region
      %250 = vsyncadd [#allocation3], 0
      %s252 = sshll.u32 [#allocation2], 4
      %s253 = int_to_ptr.vmem [resolvable:$true] %s252
      %s254 = sshll.u32 %s5, 4
      %s255 = int_to_ptr.hbm [resolvable:$true] %s254
      %257 = dma.vmem_to_hbm [thread:$0]  %s253, 128, %s255, [#allocation3]
    $region25: #{tpu_custom_call.1} parent=1 // pred_fallthru
      _
    // Predicated region
    $region26: #{tpu_custom_call.1} parent=1 // pred_check
      _
    $region27: #{tpu_custom_call.1} parent=1 // pred_check_branch
      %259 = sbr.rel (0) target = $region29
    $region28: #{tpu_custom_call.1} parent=1 // pred_region
      %261 = vsyncadd [#allocation5], 0
      %s263 = sshll.u32 [#allocation4], 4
      %s264 = int_to_ptr.vmem [resolvable:$true] %s263
      %s265 = sshll.u32 %s6, 4
      %s266 = int_to_ptr.hbm [resolvable:$true] %s265
      %268 = dma.vmem_to_hbm [thread:$0]  %s264, 64, %s266, [#allocation5]
    $region29: #{tpu_custom_call.1} parent=1 // pred_fallthru
      _
    // Predicated region
    $region30: #{tpu_custom_call.1} parent=1 // pred_check
      _
    $region31: #{tpu_custom_call.1} parent=1 // pred_check_branch
      %270 = sbr.rel (0) target = $region33
    $region32: #{tpu_custom_call.1} parent=1 // pred_region
      %272 = dma.done [#allocation3], 128
    $region33: #{tpu_custom_call.1} parent=1 // pred_fallthru
      _
    // Predicated region
    $region34: #{tpu_custom_call.1} parent=1 // pred_check
      _
    $region35: #{tpu_custom_call.1} parent=1 // pred_check_branch
      %274 = sbr.rel (0) target = $region37
    $region36: #{tpu_custom_call.1} parent=1 // pred_region
      %276 = dma.done [#allocation5], 64
    $region37: #{tpu_custom_call.1} parent=1 // pred_fallthru
      _
    %277 = vsyncpa [#allocation3], 1
    %278 = vsyncpa [#allocation5], 1

</llo_original>
